<compile_context>
chip_gen: v7x
topology: tpu7x:2x2x1
jax: 0.10.0
libtpu: 0.0.40
codegen_flags: <defaults>
</compile_context>

<pallas_src>
import functools

import jax
import jax.numpy as jnp
from jax import lax
from jax.experimental import pallas as pl
from jax.experimental.pallas import tpu as pltpu


# ---------------------------------------------------------------------------
# Pallas kernel: fused 1x1-conv (matmul) + leaky_relu(0.2) + pixel norm
# Layout: channels on sublanes, pixels on lanes (lane-dense output stores).
# ---------------------------------------------------------------------------
def _conv1x1_lrelu_pn_kernel(x_ref, w_ref, o_ref):
    # x_ref : VMEM (1, Cin,  TP)  -- one batch element, pixel tile on lanes
    # w_ref : VMEM (Cout, Cin)    -- raw 1x1 conv weight
    # o_ref : VMEM (1, Cout, TP)
    x = x_ref[0].astype(jnp.float32)                      # (Cin, TP)
    # (W/scale) @ x * scale == W @ x : WScale normalization is a forward identity.
    y = jnp.dot(w_ref[...].astype(jnp.float32), x,
                preferred_element_type=jnp.float32)       # (Cout, TP)
    # F.leaky_relu(y, negative_slope=0.2)
    y = jnp.where(y >= 0.0, y, 0.2 * y)
    # pn(y) = y / sqrt(mean(y*y, dim=channel) + 1e-8); channel = sublane axis here.
    ms = jnp.mean(y * y, axis=0, keepdims=True)           # (1, TP)
    o_ref[0] = (y * lax.rsqrt(ms + 1e-8)).astype(o_ref.dtype)


def _conv1x1_block(x_nchw, weight_oi11, *, pixel_tile=1024):
    """WScale 1x1 conv + leaky_relu(0.2) + pixel norm. NCHW in / NCHW out."""
    n, cin, hh, ww = x_nchw.shape
    cout = weight_oi11.shape[0]
    p = hh * ww

    # Native layout: (N, C, H*W). No transpose, no padding pass.
    x3 = x_nchw.reshape(n, cin, p).astype(jnp.float32)
    w2d = weight_oi11[:, :, 0, 0].astype(jnp.float32)     # (Cout, Cin)

    # Large lane-dense pixel tile; if the whole image fits, take it in one block.
    tp = p if p <= pixel_tile else pixel_tile
    grid = (n, pl.cdiv(p, tp))

    out3 = pl.pallas_call(
        _conv1x1_lrelu_pn_kernel,
        out_shape=jax.ShapeDtypeStruct((n, cout, p), jnp.float32),
        grid=grid,
        in_specs=[
            pl.BlockSpec((1, cin, tp), lambda b, i: (b, 0, i)),   # activation tile
            pl.BlockSpec((cout, cin), lambda b, i: (0, 0)),       # resident weight
        ],
        out_specs=pl.BlockSpec((1, cout, tp), lambda b, i: (b, 0, i)),
        compiler_params=pltpu.CompilerParams(
            dimension_semantics=("parallel", "parallel")),
    )(x3, w2d)

    return out3.reshape(n, cout, hh, ww)


# ---------------------------------------------------------------------------
# Spatial-adjustment glue (config-static branch, cheap preprocessing)
# ---------------------------------------------------------------------------
def _avg_pool2d_3x3_s2_p1(x):
    # F.avg_pool2d(x, 3, padding=1, stride=2), count_include_pad=True => /9 always.
    # TODO(synk): fuse the 9-tap accumulate into the Pallas kernel to remove one
    # full HBM round trip of h1 on the downsample branch.
    s = lax.reduce_window(
        x, 0.0, lax.add,
        window_dimensions=(1, 1, 3, 3),
        window_strides=(1, 1, 2, 2),
        padding=((0, 0), (0, 0), (1, 1), (1, 1)),
    )
    return s / 9.0


def _upsample_nearest_2x(x):
    # F.upsample(x, scale_factor=2)  (default mode='nearest')
    return jnp.repeat(jnp.repeat(x, 2, axis=2), 2, axis=3)


# ---------------------------------------------------------------------------
# Module-equivalent wrapper
# ---------------------------------------------------------------------------
def factorized_adjustment(h0, h1, w_conv1, w_conv2, *, in_ch, prev_in_ch, out_ch):
    if prev_in_ch < in_ch:
        # Downsample branch: pool first (changes the pixel set), then conv.
        h1 = _avg_pool2d_3x3_s2_p1(h1)
        h1 = _conv1x1_block(h1, w_conv2)
    elif prev_in_ch > in_ch:
        # Upsample branch: conv is pointwise in space, so conv-then-upsample is
        # exactly equivalent and processes 4x fewer pixels in the kernel.
        h1 = _conv1x1_block(h1, w_conv2)
        h1 = _upsample_nearest_2x(h1)
    else:
        h1 = _conv1x1_block(h1, w_conv2)
    h0 = _conv1x1_block(h0, w_conv1)
    n_params = prev_in_ch * out_ch // 4 + in_ch * out_ch // 4
    return (h0, h1), n_params


if __name__ == "__main__":
    key = jax.random.PRNGKey(0)
    k0, k1, k2, k3 = jax.random.split(key, 4)
    n, hh, ww = 2, 16, 16

    # --- Config A: prev_in_ch < in_ch -> avg_pool branch ---------------------
    in_ch, prev_in_ch, out_ch = 8, 4, 16
    h0 = jax.random.normal(k0, (n, in_ch, hh, ww), jnp.float32)       # NCHW
    h1 = jax.random.normal(k1, (n, prev_in_ch, hh, ww), jnp.float32)  # NCHW
    w_conv1 = 0.1 * jax.random.normal(k2, (out_ch // 4, in_ch, 1, 1), jnp.float32)
    w_conv2 = 0.1 * jax.random.normal(k3, (out_ch // 4, prev_in_ch, 1, 1), jnp.float32)

    fn_a = jax.jit(functools.partial(
        factorized_adjustment, in_ch=in_ch, prev_in_ch=prev_in_ch, out_ch=out_ch))
    (out0, out1), n_params = fn_a(h0, h1, w_conv1, w_conv2)
    jax.block_until_ready((out0, out1))
    assert out0.shape == (n, out_ch // 4, hh, ww), out0.shape
    assert out1.shape == (n, out_ch // 4, hh // 2, ww // 2), out1.shape
    assert int(n_params) == prev_in_ch * out_ch // 4 + in_ch * out_ch // 4

    # --- Config B: prev_in_ch > in_ch -> upsample branch (conv before upsample)
    in_ch_b, prev_in_ch_b, out_ch_b = 4, 8, 16
    h0b = jax.random.normal(k1, (n, in_ch_b, hh, ww), jnp.float32)
    h1b = jax.random.normal(k0, (n, prev_in_ch_b, hh, ww), jnp.float32)
    w1b = 0.1 * jax.random.normal(k3, (out_ch_b // 4, in_ch_b, 1, 1), jnp.float32)
    w2b = 0.1 * jax.random.normal(k2, (out_ch_b // 4, prev_in_ch_b, 1, 1), jnp.float32)

    fn_b = jax.jit(functools.partial(
        factorized_adjustment, in_ch=in_ch_b, prev_in_ch=prev_in_ch_b, out_ch=out_ch_b))
    (out0b, out1b), n_params_b = fn_b(h0b, h1b, w1b, w2b)
    jax.block_until_ready((out0b, out1b))
    assert out0b.shape == (n, out_ch_b // 4, hh, ww), out0b.shape
    assert out1b.shape == (n, out_ch_b // 4, 2 * hh, 2 * ww), out1b.shape
    assert int(n_params_b) == prev_in_ch_b * out_ch_b // 4 + in_ch_b * out_ch_b // 4

    print("KERNEL_OK")
</pallas_src>

<mosaic_0001>
module attributes {stable_mosaic.version = 11 : i64} {
  func.func @_conv1x1_lrelu_pn_kernel(%arg0: i32, %arg1: i32, %arg2: memref<1x8x256xf32, #tpu.memory_space<vmem>>, %arg3: memref<4x8xf32, #tpu.memory_space<vmem>>, %arg4: memref<1x4x256xf32, #tpu.memory_space<vmem>>) attributes {dimension_semantics = [#tpu.dimension_semantics<parallel>, #tpu.dimension_semantics<parallel>], iteration_bounds = array<i64: 2, 1>, scalar_prefetch = 0 : i64, scratch_operands = 0 : i64, tpu.core_type = #tpu.core_type<tc>, window_params = [{transform_indices = @transform_0, window_bounds = array<i64: 1, 8, 256>}, {pipeline_mode = #tpu.pipeline_mode<synchronous>, transform_indices = @transform_1, window_bounds = array<i64: 4, 8>}, {transform_indices = @transform_2, window_bounds = array<i64: 1, 4, 256>}]} {
    %c0 = arith.constant 0 : index
    %c0_0 = arith.constant 0 : index
    %c0_1 = arith.constant 0 : index
    %0 = vector.load %arg2[%c0, %c0_0, %c0_1] : memref<1x8x256xf32, #tpu.memory_space<vmem>>, vector<1x8x256xf32>
    %1 = vector.shape_cast %0 : vector<1x8x256xf32> to vector<8x256xf32>
    %c0_2 = arith.constant 0 : index
    %c0_3 = arith.constant 0 : index
    %2 = vector.load %arg3[%c0_2, %c0_3] : memref<4x8xf32, #tpu.memory_space<vmem>>, vector<4x8xf32>
    %cst = arith.constant dense<0.000000e+00> : vector<4x256xf32>
    %3 = tpu.matmul %2, %1, %cst {dimension_numbers = #tpu.dot_dimension_numbers<[1], [0], [0], [1], [0, 0, 1, 1], [], []>} : vector<4x8xf32>, vector<8x256xf32>, vector<4x256xf32> -> vector<4x256xf32>
    %cst_4 = arith.constant 0.000000e+00 : f32
    %4 = vector.broadcast %cst_4 : f32 to vector<4x256xf32>
    %5 = arith.cmpf oge, %3, %4 : vector<4x256xf32>
    %cst_5 = arith.constant 2.000000e-01 : f32
    %6 = vector.broadcast %cst_5 : f32 to vector<4x256xf32>
    %7 = arith.mulf %6, %3 : vector<4x256xf32>
    %8 = arith.select %5, %3, %7 : vector<4x256xi1>, vector<4x256xf32>
    %9 = arith.mulf %8, %8 : vector<4x256xf32>
    %cst_6 = arith.constant dense<0.000000e+00> : vector<256xf32>
    %10 = vector.multi_reduction <add>, %9, %cst_6 [0] : vector<4x256xf32> to vector<256xf32>
    %11 = vector.shape_cast %10 : vector<256xf32> to vector<1x256xf32>
    %cst_7 = arith.constant 4.000000e+00 : f32
    %12 = vector.broadcast %cst_7 : f32 to vector<1x256xf32>
    %13 = arith.divf %11, %12 : vector<1x256xf32>
    %cst_8 = arith.constant 9.99999993E-9 : f32
    %14 = vector.broadcast %cst_8 : f32 to vector<1x256xf32>
    %15 = arith.addf %13, %14 : vector<1x256xf32>
    %16 = math.rsqrt %15 : vector<1x256xf32>
    %17 = vector.broadcast %16 : vector<1x256xf32> to vector<4x256xf32>
    %18 = arith.mulf %8, %17 : vector<4x256xf32>
    %c0_9 = arith.constant 0 : index
    %c0_10 = arith.constant 0 : index
    %c0_11 = arith.constant 0 : index
    %19 = vector.load %arg4[%c0_9, %c0_10, %c0_11] : memref<1x4x256xf32, #tpu.memory_space<vmem>>, vector<1x4x256xf32>
    %20 = vector.shape_cast %19 : vector<1x4x256xf32> to vector<4x256xf32>
    %21 = vector.shape_cast %18 : vector<4x256xf32> to vector<1x4x256xf32>
    tpu.vector_store %arg4[%c0_9, %c0_10, %c0_11], %21 {strides = array<i32>} : memref<1x4x256xf32, #tpu.memory_space<vmem>>, vector<1x4x256xf32>,
    return
  }
  func.func @transform_0(%arg0: i32, %arg1: i32) -> (i32, i32, i32) {
    %c0_i32 = arith.constant 0 : i32
    %c0_i32_0 = arith.constant 0 : i32
    return %arg0, %c0_i32, %arg1 : i32, i32, i32
  }
  func.func @transform_1(%arg0: i32, %arg1: i32) -> (i32, i32) {
    %c0_i32 = arith.constant 0 : i32
    %c0_i32_0 = arith.constant 0 : i32
    %c0_i32_1 = arith.constant 0 : i32
    return %c0_i32, %c0_i32_0 : i32, i32
  }
  func.func @transform_2(%arg0: i32, %arg1: i32) -> (i32, i32, i32) {
    %c0_i32 = arith.constant 0 : i32
    %c0_i32_0 = arith.constant 0 : i32
    return %arg0, %c0_i32, %arg1 : i32, i32, i32
  }
}

module attributes {stable_mosaic.version = 11 : i64} {
  func.func @_conv1x1_lrelu_pn_kernel(%arg0: i32, %arg1: i32, %arg2: memref<1x4x64xf32, #tpu.memory_space<vmem>>, %arg3: memref<4x4xf32, #tpu.memory_space<vmem>>, %arg4: memref<1x4x64xf32, #tpu.memory_space<vmem>>) attributes {dimension_semantics = [#tpu.dimension_semantics<parallel>, #tpu.dimension_semantics<parallel>], iteration_bounds = array<i64: 2, 1>, scalar_prefetch = 0 : i64, scratch_operands = 0 : i64, tpu.core_type = #tpu.core_type<tc>, window_params = [{transform_indices = @transform_0, window_bounds = array<i64: 1, 4, 64>}, {pipeline_mode = #tpu.pipeline_mode<synchronous>, transform_indices = @transform_1, window_bounds = array<i64: 4, 4>}, {transform_indices = @transform_2, window_bounds = array<i64: 1, 4, 64>}]} {
    %c0 = arith.constant 0 : index
    %c0_0 = arith.constant 0 : index
    %c0_1 = arith.constant 0 : index
    %0 = vector.load %arg2[%c0, %c0_0, %c0_1] : memref<1x4x64xf32, #tpu.memory_space<vmem>>, vector<1x4x64xf32>
    %1 = vector.shape_cast %0 : vector<1x4x64xf32> to vector<4x64xf32>
    %c0_2 = arith.constant 0 : index
    %c0_3 = arith.constant 0 : index
    %2 = vector.load %arg3[%c0_2, %c0_3] : memref<4x4xf32, #tpu.memory_space<vmem>>, vector<4x4xf32>
    %cst = arith.constant dense<0.000000e+00> : vector<4x64xf32>
    %3 = tpu.matmul %2, %1, %cst {dimension_numbers = #tpu.dot_dimension_numbers<[1], [0], [0], [1], [0, 0, 1, 1], [], []>} : vector<4x4xf32>, vector<4x64xf32>, vector<4x64xf32> -> vector<4x64xf32>
    %cst_4 = arith.constant 0.000000e+00 : f32
    %4 = vector.broadcast %cst_4 : f32 to vector<4x64xf32>
    %5 = arith.cmpf oge, %3, %4 : vector<4x64xf32>
    %cst_5 = arith.constant 2.000000e-01 : f32
    %6 = vector.broadcast %cst_5 : f32 to vector<4x64xf32>
    %7 = arith.mulf %6, %3 : vector<4x64xf32>
    %8 = arith.select %5, %3, %7 : vector<4x64xi1>, vector<4x64xf32>
    %9 = arith.mulf %8, %8 : vector<4x64xf32>
    %cst_6 = arith.constant dense<0.000000e+00> : vector<64xf32>
    %10 = vector.multi_reduction <add>, %9, %cst_6 [0] : vector<4x64xf32> to vector<64xf32>
    %11 = vector.shape_cast %10 : vector<64xf32> to vector<1x64xf32>
    %cst_7 = arith.constant 4.000000e+00 : f32
    %12 = vector.broadcast %cst_7 : f32 to vector<1x64xf32>
    %13 = arith.divf %11, %12 : vector<1x64xf32>
    %cst_8 = arith.constant 9.99999993E-9 : f32
    %14 = vector.broadcast %cst_8 : f32 to vector<1x64xf32>
    %15 = arith.addf %13, %14 : vector<1x64xf32>
    %16 = math.rsqrt %15 : vector<1x64xf32>
    %17 = vector.broadcast %16 : vector<1x64xf32> to vector<4x64xf32>
    %18 = arith.mulf %8, %17 : vector<4x64xf32>
    %c0_9 = arith.constant 0 : index
    %c0_10 = arith.constant 0 : index
    %c0_11 = arith.constant 0 : index
    %19 = vector.load %arg4[%c0_9, %c0_10, %c0_11] : memref<1x4x64xf32, #tpu.memory_space<vmem>>, vector<1x4x64xf32>
    %20 = vector.shape_cast %19 : vector<1x4x64xf32> to vector<4x64xf32>
    %21 = vector.shape_cast %18 : vector<4x64xf32> to vector<1x4x64xf32>
    tpu.vector_store %arg4[%c0_9, %c0_10, %c0_11], %21 {strides = array<i32>} : memref<1x4x64xf32, #tpu.memory_space<vmem>>, vector<1x4x64xf32>,
    return
  }
  func.func @transform_0(%arg0: i32, %arg1: i32) -> (i32, i32, i32) {
    %c0_i32 = arith.constant 0 : i32
    %c0_i32_0 = arith.constant 0 : i32
    return %arg0, %c0_i32, %arg1 : i32, i32, i32
  }
  func.func @transform_1(%arg0: i32, %arg1: i32) -> (i32, i32) {
    %c0_i32 = arith.constant 0 : i32
    %c0_i32_0 = arith.constant 0 : i32
    %c0_i32_1 = arith.constant 0 : i32
    return %c0_i32, %c0_i32_0 : i32, i32
  }
  func.func @transform_2(%arg0: i32, %arg1: i32) -> (i32, i32, i32) {
    %c0_i32 = arith.constant 0 : i32
    %c0_i32_0 = arith.constant 0 : i32
    return %arg0, %c0_i32, %arg1 : i32, i32, i32
  }
}

</mosaic_0001>

<llo_original>
// kernel: factorized_adjustment.3
$region0: #{factorized_adjustment.3}
  #allocation0 [shape = 'u32[]', space=smem, size = 0x4, offset = 0x4, fixed_abs, tag = 'smem constant byte address 0x4 - core index']
  #allocation1 [shape = 'u32[144,128]{1,0:T(1,128)}', space=vmem, size = 0x12000, scoped, tag = 'internal scratch']
  %s0 = inlined_call_operand.vmem [shape: f32[2,8,256], index: 0, kind: input, shape index: {}]
  %s1 = inlined_call_operand.vmem [shape: f32[4,8], index: 1, kind: input, shape index: {}]
  %s2 = inlined_call_operand.vmem [shape: f32[2,4,256], index: 2, kind: output, shape index: {}]
  %s3 = sld [smem:[#allocation0]]
  $region41: #{factorized_adjustment.3} parent=0
    _
  %s5 = ssub.s32 1, %s3
  %s6 = scalar_select 0, %s5, %s3
  loop: start=0, step=1, limit=4
  $region2: #{factorized_adjustment.3} parent=0 // loop_pre_header
    _
  $region3: #{factorized_adjustment.3} parent=0 // loop_header
    %s8 = sphi 0, %s12
    %p9 = scmp.ge.s32.totalorder %s8, 4
    %s15 = sphi 0, %s27
    %s16 = sphi 0, %s23
    %s17 = sphi 0, %s15
    %s18 = sphi 0, %s16
    %s19 = sphi 0, %s17
    %s20 = sphi 0, %s18
    %s32 = sphi 0, %s34
    %s35 = sphi 0, %s32
    %s36 = sphi 0, %s35
    %s52 = sphi 0, %s36
    %s56 = sphi 0, %s56
    %s58 = sphi 0, %s56
    %s59 = sphi 0, %s58
    %s73 = sphi 0, %s59
    %s81 = sphi 0, %s83
    %s84 = sphi 0, %s81
    %s85 = sphi 0, %s84
    %s101 = sphi 0, %s85
  $region4: #{factorized_adjustment.3} parent=0 // loop_header_branch
    %11 = sbr.rel (%p9) target = $region8
  $region5: #{factorized_adjustment.3} parent=0 // loop_body
    %s13 = ssub.s32 %s8, 1
    %s14 = ssub.s32 %s8, 2
    %s21 = sadd.s32 1, %s16
    %p22 = scmp.ge.s32.totalorder %s21, 1
    %s23 = scalar_select %p22, 0, %s21
    %s24 = sadd.s32 1, %s15
    %s25 = scalar_select %p22, %s24, %s15
    %p26 = scmp.ge.s32.totalorder %s25, 2
    %s27 = scalar_select %p26, 0, %s25
    %s28 = ssub.s32 %s15, %s27
    %s29 = ssub.s32 %s16, %s23
    %s30 = sor.u32 %s28, %s29
    %p31 = scmp.eq.s32.totalorder %s30, 0
    %s33 = sadd.s32 %s32, 1
    %s34 = scalar_select %p31, %s32, %s33
    %p37 = pneg %p31
    %p38 = scmp.eq.s32.totalorder %s8, 1
    %p39 = por %p37, %p38
    %p40 = scmp.ne.s32.totalorder %s32, %s35
    %p41 = scmp.eq.s32.totalorder %s8, 0
    %p42 = por %p40, %p41
    %p43 = scmp.ne.s32.totalorder %s32, %s35
    %p44 = scmp.eq.s32.totalorder %s13, 1
    %p45 = por %p43, %p44
    %p46 = scmp.ne.s32.totalorder %s35, %s36
    %p47 = scmp.eq.s32.totalorder %s13, 0
    %p48 = por %p46, %p47
    %p49 = scmp.ne.s32.totalorder %s35, %s36
    %p50 = scmp.eq.s32.totalorder %s14, 1
    %p51 = por %p49, %p50
    %p53 = scmp.ne.s32.totalorder %s36, %s52
    %p54 = scmp.eq.s32.totalorder %s14, 0
    %p55 = por %p53, %p54
    %s57 = sadd.s32 %s56, 1
    %p60 = scmp.eq.s32.totalorder %s8, 1
    %p61 = scmp.ne.s32.totalorder %s56, %s58
    %p62 = scmp.eq.s32.totalorder %s8, 0
    %p63 = por %p61, %p62
    %p64 = scmp.ne.s32.totalorder %s56, %s58
    %p65 = scmp.eq.s32.totalorder %s13, 1
    %p66 = por %p64, %p65
    %p67 = scmp.ne.s32.totalorder %s58, %s59
    %p68 = scmp.eq.s32.totalorder %s13, 0
    %p69 = por %p67, %p68
    %p70 = scmp.ne.s32.totalorder %s58, %s59
    %p71 = scmp.eq.s32.totalorder %s14, 1
    %p72 = por %p70, %p71
    %p74 = scmp.ne.s32.totalorder %s59, %s73
    %p75 = scmp.eq.s32.totalorder %s14, 0
    %p76 = por %p74, %p75
    %s77 = ssub.s32 %s15, %s27
    %s78 = ssub.s32 %s16, %s23
    %s79 = sor.u32 %s77, %s78
    %p80 = scmp.eq.s32.totalorder %s79, 0
    %s82 = sadd.s32 %s81, 1
    %s83 = scalar_select %p80, %s81, %s82
    %p86 = pneg %p80
    %p87 = scmp.eq.s32.totalorder %s8, 1
    %p88 = por %p86, %p87
    %p89 = scmp.ne.s32.totalorder %s81, %s84
    %p90 = scmp.eq.s32.totalorder %s8, 0
    %p91 = por %p89, %p90
    %p92 = scmp.ne.s32.totalorder %s81, %s84
    %p93 = scmp.eq.s32.totalorder %s13, 1
    %p94 = por %p92, %p93
    %p95 = scmp.ne.s32.totalorder %s84, %s85
    %p96 = scmp.eq.s32.totalorder %s13, 0
    %p97 = por %p95, %p96
    %p98 = scmp.ne.s32.totalorder %s84, %s85
    %p99 = scmp.eq.s32.totalorder %s14, 1
    %p100 = por %p98, %p99
    %p102 = scmp.ne.s32.totalorder %s85, %s101
    %p103 = scmp.eq.s32.totalorder %s14, 0
    %p104 = por %p102, %p103
    %p105 = scmp.le.s32.totalorder 1, %s8
    %p106 = scmp.lt.s32.totalorder %s8, 3
    %p107 = pnand %p105, %p106
    %p108 = pneg %p107
    // Predicated region
    $region9: #{factorized_adjustment.3} parent=5 // pred_check
      _
    $region10: #{factorized_adjustment.3} parent=5 // pred_check_branch
      %110 = sbr.rel (%p107) target = $region12
    $region11: #{factorized_adjustment.3} parent=5 // pred_region
      %s111 = ssub.s32 %s8, 1
      // Predicated region
      $region13: #{factorized_adjustment.3} parent=11 // pred_check
        %p112 = pneg %p69
      $region14: #{factorized_adjustment.3} parent=11 // pred_check_branch
        %114 = sbr.rel (%p112) target = $region16
      $region15: #{factorized_adjustment.3} parent=11 // pred_region
        _
      $region16: #{factorized_adjustment.3} parent=11 // pred_fallthru
        _
    $region12: #{factorized_adjustment.3} parent=5 // pred_fallthru
      _
    %p115 = scmp.lt.s32.totalorder %s8, 2
    // Predicated region
    $region17: #{factorized_adjustment.3} parent=5 // pred_check
      %p116 = pneg %p115
    $region18: #{factorized_adjustment.3} parent=5 // pred_check_branch
      %118 = sbr.rel (%p116) target = $region20
    $region19: #{factorized_adjustment.3} parent=5 // pred_region
      // Predicated region
      $region21: #{factorized_adjustment.3} parent=19 // pred_check
        %p119 = pneg %p42
      $region22: #{factorized_adjustment.3} parent=19 // pred_check_branch
        %121 = sbr.rel (%p119) target = $region24
      $region23: #{factorized_adjustment.3} parent=19 // pred_region
        %s122 = smul.u32 2, %s16
        %p123 = scmp.lt.s32.totalorder %s15, 1
        %s124 = scalar_select %p123, %s15, 1
        %p125 = scmp.lt.s32.totalorder %s122, 1
        %s126 = scalar_select %p125, %s122, 1
        %s127 = smul.addr %s124, 2
        %s128 = sadd.s32 %s126, %s127
        %s129 = smul.addr %s128, 8
        %s130 = scalar_lea.vmem %s0, %s129
        %s131 = smul.u32 2, %s16
      $region24: #{factorized_adjustment.3} parent=19 // pred_fallthru
        _
    $region20: #{factorized_adjustment.3} parent=5 // pred_fallthru
      _
    %p132 = scmp.le.s32.totalorder 1, %s8
    %p133 = scmp.lt.s32.totalorder %s8, 3
    %p134 = pnand %p132, %p133
    %p135 = pneg %p134
    // Predicated region
    $region25: #{factorized_adjustment.3} parent=5 // pred_check
      _
    $region26: #{factorized_adjustment.3} parent=5 // pred_check_branch
      %137 = sbr.rel (%p134) target = $region28
    $region27: #{factorized_adjustment.3} parent=5 // pred_region
      %s138 = ssub.s32 %s8, 1
      %s139 = smul.u32 2, %s18
      %p140 = scmp.lt.s32.totalorder %s17, 1
      %s141 = scalar_select %p140, %s17, 1
      %p142 = scmp.lt.s32.totalorder %s139, 1
      %s143 = scalar_select %p142, %s139, 1
      %s144 = smul.addr %s141, 2
      %s145 = sadd.s32 %s143, %s144
      %s146 = smul.addr %s145, 8
      %s147 = scalar_lea.vmem %s0, %s146
      %p148 = pneg %p48
      %p149 = pneg %p45
      %p150 = pneg %p69
      %p151 = pneg %p66
      %p152 = pneg %p97
      %p153 = pneg %p94
      %s154 = smul.u32 2, %s18
      %p155 = scmp.lt.s32.totalorder %s17, 1
      %s156 = scalar_select %p155, %s17, 1
      %p157 = scmp.lt.s32.totalorder %s154, 1
      %s158 = scalar_select %p157, %s154, 1
      %s159 = smul.addr %s156, 2
      %s160 = sadd.s32 %s158, %s159
      %s161 = smul.addr %s160, 4
      %s162 = scalar_lea.vmem %s2, %s161
      %s163 = smul.u32 2, %s18
      %p164 = scmp.lt.s32.totalorder %s17, 1
      %s165 = scalar_select %p164, %s17, 1
      %p166 = scmp.lt.s32.totalorder %s163, 1
      %s167 = scalar_select %p166, %s163, 1
      %s168 = smul.addr %s165, 2
      %s169 = sadd.s32 %s167, %s168
      %s170 = smul.addr %s169, 8
      %s171 = scalar_lea.vmem %s0, %s170
      %s172 = smul.u32 2, %s18
      %s173 = smul.u32 2, %s18
      %p174 = scmp.lt.s32.totalorder %s17, 1
      %s175 = scalar_select %p174, %s17, 1
      %p176 = scmp.lt.s32.totalorder %s173, 1
      %s177 = scalar_select %p176, %s173, 1
      %s178 = smul.addr %s175, 2
      %s179 = sadd.s32 %s177, %s178
      %s180 = smul.addr %s179, 4
      %s181 = scalar_lea.vmem %s2, %s180
      %s182 = smul.u32 2, %s18
      %v183 = vld [vmem:[%s171] sm:$0xff]
      %v184 = vld [vmem:[%s171 + $0x8] sm:$0xff]
      %v185 = vld [vmem:[%s1] sm:$0xf]
      %vm186 = vcmask 64512
      %v188 = vsel %vm186, %v185, 0
      %190 = vmatprep.subr.mxu0 %v184
      %191 = vmatpush1.msra.mxu0 %v183
      %192 = vmatprep.subr.mxu0 0.0
      %193 = vmatpush1.msra.mxu0 0.0
      %194 = vmatprep.subr.mxu0 0.0
      %195 = vmatpush1.msra.mxu0 0.0
      %196 = vmatprep.subr.mxu0 0.0
      %197 = vmatpush1.msra.mxu0 0.0
      %198 = vmatprep.subr.mxu0 0.0
      %199 = vmatpush1.msra.mxu0 0.0
      %200 = vmatprep.subr.mxu0 0.0
      %201 = vmatpush1.msra.mxu0 0.0
      %202 = vmatprep.subr.mxu0 0.0
      %203 = vmatpush1.msra.mxu0 0.0
      %204 = vmatprep.subr.mxu0 0.0
      %205 = vmatpush1.msra.mxu0 0.0
      %206 = vmatprep.subr.mxu0 0.0
      %207 = vmatpush1.msra.mxu0 0.0
      %208 = vmatprep.subr.mxu0 0.0
      %209 = vmatpush1.msra.mxu0 0.0
      %210 = vmatprep.subr.mxu0 0.0
      %211 = vmatpush1.msra.mxu0 0.0
      %212 = vmatprep.subr.mxu0 0.0
      %213 = vmatpush1.msra.mxu0 0.0
      %214 = vmatprep.subr.mxu0 0.0
      %215 = vmatpush1.msra.mxu0 0.0
      %216 = vmatprep.subr.mxu0 0.0
      %217 = vmatpush1.msra.mxu0 0.0
      %218 = vmatprep.subr.mxu0 0.0
      %219 = vmatpush1.msra.mxu0 0.0
      %220 = vmatprep.subr.mxu0 0.0
      %221 = vmatpush1.msra.mxu0 0.0
      %222 = vmatprep.subr.mxu0 0.0
      %223 = vmatpush1.msra.mxu0 0.0
      %224 = vmatprep.subr.mxu0 0.0
      %225 = vmatpush1.msra.mxu0 0.0
      %226 = vmatprep.subr.mxu0 0.0
      %227 = vmatpush1.msra.mxu0 0.0
      %228 = vmatprep.subr.mxu0 0.0
      %229 = vmatpush1.msra.mxu0 0.0
      %230 = vmatprep.subr.mxu0 0.0
      %231 = vmatpush1.msra.mxu0 0.0
      %232 = vmatprep.subr.mxu0 0.0
      %233 = vmatpush1.msra.mxu0 0.0
      %234 = vmatprep.subr.mxu0 0.0
      %235 = vmatpush1.msra.mxu0 0.0
      %236 = vmatprep.subr.mxu0 0.0
      %237 = vmatpush1.msra.mxu0 0.0
      %238 = vmatprep.subr.mxu0 0.0
      %239 = vmatpush1.msra.mxu0 0.0
      %240 = vmatprep.subr.mxu0 0.0
      %241 = vmatpush1.msra.mxu0 0.0
      %242 = vmatprep.subr.mxu0 0.0
      %243 = vmatpush1.msra.mxu0 0.0
      %244 = vmatprep.subr.mxu0 0.0
      %245 = vmatpush1.msra.mxu0 0.0
      %246 = vmatprep.subr.mxu0 0.0
      %247 = vmatpush1.msra.mxu0 0.0
      %248 = vmatprep.subr.mxu0 0.0
      %249 = vmatpush1.msra.mxu0 0.0
      %250 = vmatprep.subr.mxu0 0.0
      %251 = vmatpush1.msra.mxu0 0.0
      %252 = vmatprep.subr.mxu0 0.0
      %253 = vmatpush1.msra.mxu0 0.0
      %254 = vmatprep.mubr.f32.mxu0 0.0
      %255 = vmatmul.mubr.f32.gmra.mrb[0].mxu0 %v188
      %v256 = vpop.f32.mrb[0].mxu0
      %v257 = vadd.f32 0.0, %v256
      %v258 = vpop.f32.mrb[0].mxu0
      %v259 = vadd.f32 0.0, %v258
      %260 = vdwg.mxu0
      %vm261 = vcmp.ge.f32.partialorder %v257, 0.0
      %vm262 = vcmp.ge.f32.partialorder %v259, 0.0
      %v263 = vmul.f32 %v257, 0.2
      %v264 = vmul.f32 %v259, 0.2
      %v265 = vsel %vm261, %v257, %v263
      %v266 = vsel %vm262, %v259, %v264
      %v267 = vmul.f32 %v265, %v265
      %v268 = vmul.f32 %v266, %v266
      %vm269 = vcmask 1043456
      %v270 = vsel %vm269, %v267, 0.0
      %v271 = vrot.slane %v270, 4
      %v272 = vadd.f32 %v270, %v271
      %v273 = vrot.slane %v272, 2
      %v274 = vadd.f32 %v272, %v273
      %v275 = vrot.slane %v274, 1
      %v276 = vadd.f32 %v274, %v275
      %v277 = vsel %vm269, %v268, 0.0
      %v278 = vrot.slane %v277, 4
      %v279 = vadd.f32 %v277, %v278
      %v280 = vrot.slane %v279, 2
      %v281 = vadd.f32 %v279, %v280
      %v282 = vrot.slane %v281, 1
      %v283 = vadd.f32 %v281, %v282
      %v284 = vrcp.pop 4.0
      %v285 = vmul.f32 %v276, %v284
      %v286 = vmul.f32 %v283, %v284
      %v287 = vadd.f32 %v285, 1e-08
      %v288 = vadd.f32 %v286, 1e-08
      %v289 = vrsqrt.pop %v287
      %v290 = vrsqrt.pop %v288
      %v291 = vmul.f32 %v265, %v289
      %v292 = vmul.f32 %v266, %v290
      %v295 = vcombine.low %v291, %v292
      %297 = vst [vmem:[%s181] sm:$0xff] %v295
      %s298 = smul.u32 2, %s18
      %p299 = scmp.lt.s32.totalorder %s17, 1
      %s300 = scalar_select %p299, %s17, 1
      %p301 = scmp.lt.s32.totalorder %s298, 1
      %s302 = scalar_select %p301, %s298, 1
      %s303 = smul.addr %s300, 2
      %s304 = sadd.s32 %s302, %s303
      %s305 = smul.addr %s304, 4
      %s306 = scalar_lea.vmem %s2, %s305
      // Predicated region
      $region29: #{factorized_adjustment.3} parent=27 // pred_check
        %p307 = pneg %p94
      $region30: #{factorized_adjustment.3} parent=27 // pred_check_branch
        %309 = sbr.rel (%p307) target = $region32
      $region31: #{factorized_adjustment.3} parent=27 // pred_region
        %s310 = smul.u32 2, %s18
      $region32: #{factorized_adjustment.3} parent=27 // pred_fallthru
        _
    $region28: #{factorized_adjustment.3} parent=5 // pred_fallthru
      _
    %p311 = scmp.le.s32.totalorder 2, %s8
    // Predicated region
    $region33: #{factorized_adjustment.3} parent=5 // pred_check
      %p312 = pneg %p311
    $region34: #{factorized_adjustment.3} parent=5 // pred_check_branch
      %314 = sbr.rel (%p312) target = $region36
    $region35: #{factorized_adjustment.3} parent=5 // pred_region
      %s315 = ssub.s32 %s8, 2
      // Predicated region
      $region37: #{factorized_adjustment.3} parent=35 // pred_check
        %p316 = pneg %p100
      $region38: #{factorized_adjustment.3} parent=35 // pred_check_branch
        %318 = sbr.rel (%p316) target = $region40
      $region39: #{factorized_adjustment.3} parent=35 // pred_region
        %s319 = smul.u32 2, %s20
        %p320 = scmp.lt.s32.totalorder %s19, 1
        %s321 = scalar_select %p320, %s19, 1
        %p322 = scmp.lt.s32.totalorder %s319, 1
        %s323 = scalar_select %p322, %s319, 1
        %s324 = smul.addr %s321, 2
        %s325 = sadd.s32 %s323, %s324
        %s326 = smul.addr %s325, 4
        %s327 = scalar_lea.vmem %s2, %s326
      $region40: #{factorized_adjustment.3} parent=35 // pred_fallthru
        _
    $region36: #{factorized_adjustment.3} parent=5 // pred_fallthru
      _
  $region6: #{factorized_adjustment.3} parent=0 // loop_footer
    %s12 = sadd.s32 1, %s8
  $region7: #{factorized_adjustment.3} parent=0 // loop_footer_branch
    %7 = sbr.rel target = $region3
  $region8: #{factorized_adjustment.3} parent=0 // loop_exit
    _

// kernel: factorized_adjustment.2
$region0: #{factorized_adjustment.2}
  #allocation0 [shape = 'u32[]', space=smem, size = 0x4, offset = 0x4, fixed_abs, tag = 'smem constant byte address 0x4 - core index']
  #allocation1 [shape = 'u32[144,128]{1,0:T(1,128)}', space=vmem, size = 0x12000, scoped, tag = 'internal scratch']
  %s0 = inlined_call_operand.vmem [shape: f32[2,4,64], index: 0, kind: input, shape index: {}]
  %s1 = inlined_call_operand.vmem [shape: f32[4,4], index: 1, kind: input, shape index: {}]
  %s2 = inlined_call_operand.vmem [shape: f32[2,4,64], index: 2, kind: output, shape index: {}]
  %s3 = sld [smem:[#allocation0]]
  $region41: #{factorized_adjustment.2} parent=0
    _
  %s5 = ssub.s32 1, %s3
  %s6 = scalar_select 0, %s5, %s3
  loop: start=0, step=1, limit=4
  $region2: #{factorized_adjustment.2} parent=0 // loop_pre_header
    _
  $region3: #{factorized_adjustment.2} parent=0 // loop_header
    %s8 = sphi 0, %s12
    %p9 = scmp.ge.s32.totalorder %s8, 4
    %s15 = sphi 0, %s27
    %s16 = sphi 0, %s23
    %s17 = sphi 0, %s15
    %s18 = sphi 0, %s16
    %s19 = sphi 0, %s17
    %s20 = sphi 0, %s18
    %s32 = sphi 0, %s34
    %s35 = sphi 0, %s32
    %s36 = sphi 0, %s35
    %s52 = sphi 0, %s36
    %s56 = sphi 0, %s56
    %s58 = sphi 0, %s56
    %s59 = sphi 0, %s58
    %s73 = sphi 0, %s59
    %s81 = sphi 0, %s83
    %s84 = sphi 0, %s81
    %s85 = sphi 0, %s84
    %s101 = sphi 0, %s85
  $region4: #{factorized_adjustment.2} parent=0 // loop_header_branch
    %11 = sbr.rel (%p9) target = $region8
  $region5: #{factorized_adjustment.2} parent=0 // loop_body
    %s13 = ssub.s32 %s8, 1
    %s14 = ssub.s32 %s8, 2
    %s21 = sadd.s32 1, %s16
    %p22 = scmp.ge.s32.totalorder %s21, 1
    %s23 = scalar_select %p22, 0, %s21
    %s24 = sadd.s32 1, %s15
    %s25 = scalar_select %p22, %s24, %s15
    %p26 = scmp.ge.s32.totalorder %s25, 2
    %s27 = scalar_select %p26, 0, %s25
    %s28 = ssub.s32 %s15, %s27
    %s29 = ssub.s32 %s16, %s23
    %s30 = sor.u32 %s28, %s29
    %p31 = scmp.eq.s32.totalorder %s30, 0
    %s33 = sadd.s32 %s32, 1
    %s34 = scalar_select %p31, %s32, %s33
    %p37 = pneg %p31
    %p38 = scmp.eq.s32.totalorder %s8, 1
    %p39 = por %p37, %p38
    %p40 = scmp.ne.s32.totalorder %s32, %s35
    %p41 = scmp.eq.s32.totalorder %s8, 0
    %p42 = por %p40, %p41
    %p43 = scmp.ne.s32.totalorder %s32, %s35
    %p44 = scmp.eq.s32.totalorder %s13, 1
    %p45 = por %p43, %p44
    %p46 = scmp.ne.s32.totalorder %s35, %s36
    %p47 = scmp.eq.s32.totalorder %s13, 0
    %p48 = por %p46, %p47
    %p49 = scmp.ne.s32.totalorder %s35, %s36
    %p50 = scmp.eq.s32.totalorder %s14, 1
    %p51 = por %p49, %p50
    %p53 = scmp.ne.s32.totalorder %s36, %s52
    %p54 = scmp.eq.s32.totalorder %s14, 0
    %p55 = por %p53, %p54
    %s57 = sadd.s32 %s56, 1
    %p60 = scmp.eq.s32.totalorder %s8, 1
    %p61 = scmp.ne.s32.totalorder %s56, %s58
    %p62 = scmp.eq.s32.totalorder %s8, 0
    %p63 = por %p61, %p62
    %p64 = scmp.ne.s32.totalorder %s56, %s58
    %p65 = scmp.eq.s32.totalorder %s13, 1
    %p66 = por %p64, %p65
    %p67 = scmp.ne.s32.totalorder %s58, %s59
    %p68 = scmp.eq.s32.totalorder %s13, 0
    %p69 = por %p67, %p68
    %p70 = scmp.ne.s32.totalorder %s58, %s59
    %p71 = scmp.eq.s32.totalorder %s14, 1
    %p72 = por %p70, %p71
    %p74 = scmp.ne.s32.totalorder %s59, %s73
    %p75 = scmp.eq.s32.totalorder %s14, 0
    %p76 = por %p74, %p75
    %s77 = ssub.s32 %s15, %s27
    %s78 = ssub.s32 %s16, %s23
    %s79 = sor.u32 %s77, %s78
    %p80 = scmp.eq.s32.totalorder %s79, 0
    %s82 = sadd.s32 %s81, 1
    %s83 = scalar_select %p80, %s81, %s82
    %p86 = pneg %p80
    %p87 = scmp.eq.s32.totalorder %s8, 1
    %p88 = por %p86, %p87
    %p89 = scmp.ne.s32.totalorder %s81, %s84
    %p90 = scmp.eq.s32.totalorder %s8, 0
    %p91 = por %p89, %p90
    %p92 = scmp.ne.s32.totalorder %s81, %s84
    %p93 = scmp.eq.s32.totalorder %s13, 1
    %p94 = por %p92, %p93
    %p95 = scmp.ne.s32.totalorder %s84, %s85
    %p96 = scmp.eq.s32.totalorder %s13, 0
    %p97 = por %p95, %p96
    %p98 = scmp.ne.s32.totalorder %s84, %s85
    %p99 = scmp.eq.s32.totalorder %s14, 1
    %p100 = por %p98, %p99
    %p102 = scmp.ne.s32.totalorder %s85, %s101
    %p103 = scmp.eq.s32.totalorder %s14, 0
    %p104 = por %p102, %p103
    %p105 = scmp.le.s32.totalorder 1, %s8
    %p106 = scmp.lt.s32.totalorder %s8, 3
    %p107 = pnand %p105, %p106
    %p108 = pneg %p107
    // Predicated region
    $region9: #{factorized_adjustment.2} parent=5 // pred_check
      _
    $region10: #{factorized_adjustment.2} parent=5 // pred_check_branch
      %110 = sbr.rel (%p107) target = $region12
    $region11: #{factorized_adjustment.2} parent=5 // pred_region
      %s111 = ssub.s32 %s8, 1
      // Predicated region
      $region13: #{factorized_adjustment.2} parent=11 // pred_check
        %p112 = pneg %p69
      $region14: #{factorized_adjustment.2} parent=11 // pred_check_branch
        %114 = sbr.rel (%p112) target = $region16
      $region15: #{factorized_adjustment.2} parent=11 // pred_region
        _
      $region16: #{factorized_adjustment.2} parent=11 // pred_fallthru
        _
    $region12: #{factorized_adjustment.2} parent=5 // pred_fallthru
      _
    %p115 = scmp.lt.s32.totalorder %s8, 2
    // Predicated region
    $region17: #{factorized_adjustment.2} parent=5 // pred_check
      %p116 = pneg %p115
    $region18: #{factorized_adjustment.2} parent=5 // pred_check_branch
      %118 = sbr.rel (%p116) target = $region20
    $region19: #{factorized_adjustment.2} parent=5 // pred_region
      // Predicated region
      $region21: #{factorized_adjustment.2} parent=19 // pred_check
        %p119 = pneg %p42
      $region22: #{factorized_adjustment.2} parent=19 // pred_check_branch
        %121 = sbr.rel (%p119) target = $region24
      $region23: #{factorized_adjustment.2} parent=19 // pred_region
        %p122 = scmp.lt.s32.totalorder %s15, 1
        %s123 = scalar_select %p122, %s15, 1
        %p124 = scmp.lt.s32.totalorder %s16, 0
        %s125 = scalar_select %p124, %s16, 0
        %s126 = sadd.s32 %s125, %s123
        %s127 = smul.addr %s126, 4
        %s128 = scalar_lea.vmem %s0, %s127
      $region24: #{factorized_adjustment.2} parent=19 // pred_fallthru
        _
    $region20: #{factorized_adjustment.2} parent=5 // pred_fallthru
      _
    %p129 = scmp.le.s32.totalorder 1, %s8
    %p130 = scmp.lt.s32.totalorder %s8, 3
    %p131 = pnand %p129, %p130
    %p132 = pneg %p131
    // Predicated region
    $region25: #{factorized_adjustment.2} parent=5 // pred_check
      _
    $region26: #{factorized_adjustment.2} parent=5 // pred_check_branch
      %134 = sbr.rel (%p131) target = $region28
    $region27: #{factorized_adjustment.2} parent=5 // pred_region
      %s135 = ssub.s32 %s8, 1
      %p136 = scmp.lt.s32.totalorder %s17, 1
      %s137 = scalar_select %p136, %s17, 1
      %p138 = scmp.lt.s32.totalorder %s18, 0
      %s139 = scalar_select %p138, %s18, 0
      %s140 = sadd.s32 %s139, %s137
      %s141 = smul.addr %s140, 4
      %s142 = scalar_lea.vmem %s0, %s141
      %p143 = pneg %p48
      %p144 = pneg %p45
      %p145 = pneg %p69
      %p146 = pneg %p66
      %p147 = pneg %p97
      %p148 = pneg %p94
      %p149 = scmp.lt.s32.totalorder %s17, 1
      %s150 = scalar_select %p149, %s17, 1
      %p151 = scmp.lt.s32.totalorder %s18, 0
      %s152 = scalar_select %p151, %s18, 0
      %s153 = sadd.s32 %s152, %s150
      %s154 = smul.addr %s153, 4
      %s155 = scalar_lea.vmem %s2, %s154
      %p156 = scmp.lt.s32.totalorder %s17, 1
      %s157 = scalar_select %p156, %s17, 1
      %p158 = scmp.lt.s32.totalorder %s18, 0
      %s159 = scalar_select %p158, %s18, 0
      %s160 = sadd.s32 %s159, %s157
      %s161 = smul.addr %s160, 4
      %s162 = scalar_lea.vmem %s0, %s161
      %p163 = scmp.lt.s32.totalorder %s17, 1
      %s164 = scalar_select %p163, %s17, 1
      %p165 = scmp.lt.s32.totalorder %s18, 0
      %s166 = scalar_select %p165, %s18, 0
      %s167 = sadd.s32 %s166, %s164
      %s168 = smul.addr %s167, 4
      %s169 = scalar_lea.vmem %s2, %s168
      %v170 = vld [vmem:[%s162] sm:$0xf]
      %v171 = vld [vmem:[%s1] sm:$0xf]
      %vm172 = vcmask 31744
      %v174 = vsel %vm172, %v171, 0
      %vm176 = vcmask 1043456
      %v178 = vsel %vm176, %v170, 0
      %180 = vmatprep.subr.mxu0 0.0
      %181 = vmatpush1.msra.mxu0 %v178
      %182 = vmatprep.subr.mxu0 0.0
      %183 = vmatpush1.msra.mxu0 0.0
      %184 = vmatprep.subr.mxu0 0.0
      %185 = vmatpush1.msra.mxu0 0.0
      %186 = vmatprep.subr.mxu0 0.0
      %187 = vmatpush1.msra.mxu0 0.0
      %188 = vmatprep.subr.mxu0 0.0
      %189 = vmatpush1.msra.mxu0 0.0
      %190 = vmatprep.subr.mxu0 0.0
      %191 = vmatpush1.msra.mxu0 0.0
      %192 = vmatprep.subr.mxu0 0.0
      %193 = vmatpush1.msra.mxu0 0.0
      %194 = vmatprep.subr.mxu0 0.0
      %195 = vmatpush1.msra.mxu0 0.0
      %196 = vmatprep.subr.mxu0 0.0
      %197 = vmatpush1.msra.mxu0 0.0
      %198 = vmatprep.subr.mxu0 0.0
      %199 = vmatpush1.msra.mxu0 0.0
      %200 = vmatprep.subr.mxu0 0.0
      %201 = vmatpush1.msra.mxu0 0.0
      %202 = vmatprep.subr.mxu0 0.0
      %203 = vmatpush1.msra.mxu0 0.0
      %204 = vmatprep.subr.mxu0 0.0
      %205 = vmatpush1.msra.mxu0 0.0
      %206 = vmatprep.subr.mxu0 0.0
      %207 = vmatpush1.msra.mxu0 0.0
      %208 = vmatprep.subr.mxu0 0.0
      %209 = vmatpush1.msra.mxu0 0.0
      %210 = vmatprep.subr.mxu0 0.0
      %211 = vmatpush1.msra.mxu0 0.0
      %212 = vmatprep.subr.mxu0 0.0
      %213 = vmatpush1.msra.mxu0 0.0
      %214 = vmatprep.subr.mxu0 0.0
      %215 = vmatpush1.msra.mxu0 0.0
      %216 = vmatprep.subr.mxu0 0.0
      %217 = vmatpush1.msra.mxu0 0.0
      %218 = vmatprep.subr.mxu0 0.0
      %219 = vmatpush1.msra.mxu0 0.0
      %220 = vmatprep.subr.mxu0 0.0
      %221 = vmatpush1.msra.mxu0 0.0
      %222 = vmatprep.subr.mxu0 0.0
      %223 = vmatpush1.msra.mxu0 0.0
      %224 = vmatprep.subr.mxu0 0.0
      %225 = vmatpush1.msra.mxu0 0.0
      %226 = vmatprep.subr.mxu0 0.0
      %227 = vmatpush1.msra.mxu0 0.0
      %228 = vmatprep.subr.mxu0 0.0
      %229 = vmatpush1.msra.mxu0 0.0
      %230 = vmatprep.subr.mxu0 0.0
      %231 = vmatpush1.msra.mxu0 0.0
      %232 = vmatprep.subr.mxu0 0.0
      %233 = vmatpush1.msra.mxu0 0.0
      %234 = vmatprep.subr.mxu0 0.0
      %235 = vmatpush1.msra.mxu0 0.0
      %236 = vmatprep.subr.mxu0 0.0
      %237 = vmatpush1.msra.mxu0 0.0
      %238 = vmatprep.subr.mxu0 0.0
      %239 = vmatpush1.msra.mxu0 0.0
      %240 = vmatprep.subr.mxu0 0.0
      %241 = vmatpush1.msra.mxu0 0.0
      %242 = vmatprep.subr.mxu0 0.0
      %243 = vmatpush1.msra.mxu0 0.0
      %244 = vmatprep.mubr.f32.mxu0 0.0
      %245 = vmatmul.mubr.f32.gmra.mrb[0].mxu0 %v174
      %v246 = vpop.f32.mrb[0].mxu0
      %v247 = vadd.f32 0.0, %v246
      %v248 = vpop.f32.mrb[0].mxu0
      %249 = vdwg.mxu0
      %vm250 = vcmp.ge.f32.partialorder %v247, 0.0
      %v251 = vmul.f32 %v247, 0.2
      %v252 = vsel %vm250, %v247, %v251
      %v253 = vmul.f32 %v252, %v252
      %vm254 = vcmask 519168
      %v255 = vsel %vm254, %v253, 0.0
      %v256 = vrot.slane %v255, 4
      %v257 = vadd.f32 %v255, %v256
      %v258 = vrot.slane %v257, 2
      %v259 = vadd.f32 %v257, %v258
      %v260 = vrot.slane %v259, 1
      %v261 = vadd.f32 %v259, %v260
      %v262 = vrcp.pop 4.0
      %v263 = vmul.f32 %v261, %v262
      %v264 = vadd.f32 %v263, 1e-08
      %v265 = vrsqrt.pop %v264
      %v266 = vmul.f32 %v252, %v265
      %267 = vst.msk [vmem:[%s169] sm:$0xf] %vm254, %v266
      %p268 = scmp.lt.s32.totalorder %s17, 1
      %s269 = scalar_select %p268, %s17, 1
      %p270 = scmp.lt.s32.totalorder %s18, 0
      %s271 = scalar_select %p270, %s18, 0
      %s272 = sadd.s32 %s271, %s269
      %s273 = smul.addr %s272, 4
      %s274 = scalar_lea.vmem %s2, %s273
      // Predicated region
      $region29: #{factorized_adjustment.2} parent=27 // pred_check
        %p275 = pneg %p94
      $region30: #{factorized_adjustment.2} parent=27 // pred_check_branch
        %277 = sbr.rel (%p275) target = $region32
      $region31: #{factorized_adjustment.2} parent=27 // pred_region
        _
      $region32: #{factorized_adjustment.2} parent=27 // pred_fallthru
        _
    $region28: #{factorized_adjustment.2} parent=5 // pred_fallthru
      _
    %p278 = scmp.le.s32.totalorder 2, %s8
    // Predicated region
    $region33: #{factorized_adjustment.2} parent=5 // pred_check
      %p279 = pneg %p278
    $region34: #{factorized_adjustment.2} parent=5 // pred_check_branch
      %281 = sbr.rel (%p279) target = $region36
    $region35: #{factorized_adjustment.2} parent=5 // pred_region
      %s282 = ssub.s32 %s8, 2
      // Predicated region
      $region37: #{factorized_adjustment.2} parent=35 // pred_check
        %p283 = pneg %p100
      $region38: #{factorized_adjustment.2} parent=35 // pred_check_branch
        %285 = sbr.rel (%p283) target = $region40
      $region39: #{factorized_adjustment.2} parent=35 // pred_region
        %p286 = scmp.lt.s32.totalorder %s19, 1
        %s287 = scalar_select %p286, %s19, 1
        %p288 = scmp.lt.s32.totalorder %s20, 0
        %s289 = scalar_select %p288, %s20, 0
        %s290 = sadd.s32 %s289, %s287
        %s291 = smul.addr %s290, 4
        %s292 = scalar_lea.vmem %s2, %s291
      $region40: #{factorized_adjustment.2} parent=35 // pred_fallthru
        _
    $region36: #{factorized_adjustment.2} parent=5 // pred_fallthru
      _
  $region6: #{factorized_adjustment.2} parent=0 // loop_footer
    %s12 = sadd.s32 1, %s8
  $region7: #{factorized_adjustment.2} parent=0 // loop_footer_branch
    %7 = sbr.rel target = $region3
  $region8: #{factorized_adjustment.2} parent=0 // loop_exit
    _

</llo_original>
